<compile_context>
chip_gen: v5e
topology: v5e:2x2
jax: 0.10.0
libtpu: 0.0.40
codegen_flags: <defaults>
</compile_context>

<pallas_src>
import functools
import math

import jax
import jax.numpy as jnp
from jax.experimental import pallas as pl
from jax.experimental.pallas import tpu as pltpu

LN_EPS = 1e-5  # torch.nn.LayerNorm default
_MIB = 1024 * 1024


# --------------------------------------------------------------------------- #
# Config helpers                                                              #
# --------------------------------------------------------------------------- #
def _round_up(x, m):
    return (x + m - 1) // m * m


@functools.lru_cache(maxsize=1)
def _vmem_capacity_bytes():
    """Physical VMEM per TensorCore; conservative 64 MiB fallback (v7x-sized)."""
    try:
        return int(pltpu.get_tpu_info().vmem_capacity_bytes)
    except Exception:
        return 64 * _MIB


def _divisor_chunks(hidden, target):
    """Hidden-chunk candidates: divisors of hidden, multiples of 128, largest first."""
    cands = []
    th = (min(target, hidden) // 128) * 128
    while th >= 128:
        if hidden % th == 0:
            cands.append(th)
        th -= 128
    if not cands:
        cands = [hidden]  # un-tiled hidden axis fallback
    return cands


def _resident_vmem_bytes(tm, dim, hidden, io_bytes):
    """VMEM footprint of the weight-resident path (weights counted double-buffered)."""
    buf = 2
    x_io = buf * tm * dim * io_bytes                 # x tile in + out tile
    weights = buf * 2 * dim * hidden * 2             # W1 + W2, bf16
    small = buf * (3 * dim + hidden) * 4             # gamma, beta, b2, b1
    inter = 2 * tm * hidden * 4                      # f32 hidden activations / GELU temp
    return x_io + weights + small + inter


def _streamed_vmem_bytes(tm, dim, th, io_bytes, acc_scratch):
    """VMEM footprint of the streamed-weights path."""
    buf = 2
    x_io = buf * tm * dim * io_bytes
    weights = buf * 2 * dim * th * 2                 # W1 chunk + W2 chunk, bf16
    small = buf * (3 * dim + th) * 4
    scratch = tm * dim * 2 + (tm * dim * 4 if acc_scratch else 0)   # xn bf16 (+ acc f32)
    inter = 2 * tm * th * 4                          # f32 hidden chunk / GELU temp
    return x_io + weights + small + scratch + inter


def _choose_config(M, dim, hidden, io_bytes, acc_scratch):
    """Pick (mode, tm, th, vmem budget) per TPU generation."""
    vmem_cap = _vmem_capacity_bytes()
    two_tc = vmem_cap <= 64 * _MIB          # v7x heuristic: 2 TCs, 64 MiB VMEM
    budget = int(vmem_cap * 0.8)            # leave Mosaic internal-scratch headroom

    tm_target = 256 if two_tc else 512
    th_target = 512 if two_tc else 1024

    tm = min(tm_target, _round_up(M, 8))
    if two_tc and _round_up(M, tm) <= tm:   # a single row tile would idle one TC
        tm_half = _round_up((tm + 1) // 2, 8)
        if 8 <= tm_half < tm:
            tm = tm_half

    # Prefer resident weights (removes all W1/W2 re-streaming); shrink tm if needed.
    tm_res = tm
    while tm_res > 128 and _resident_vmem_bytes(tm_res, dim, hidden, io_bytes) > budget:
        tm_res = max(128, _round_up(tm_res // 2, 8))
    if _resident_vmem_bytes(tm_res, dim, hidden, io_bytes) <= budget:
        return {"mode": "resident", "tm": tm_res, "th": hidden, "budget": budget}

    # Streamed fallback: shrink th first, then tm, until the footprint fits.
    tm_s = tm
    while True:
        for th in _divisor_chunks(hidden, th_target):
            if _streamed_vmem_bytes(tm_s, dim, th, io_bytes, acc_scratch) <= budget:
                return {"mode": "streamed", "tm": tm_s, "th": th, "budget": budget}
        if tm_s <= 8:
            break
        tm_s = max(8, _round_up(tm_s // 2, 8))
    # Best effort: smallest tiles even if the (conservative) estimate says tight.
    return {"mode": "streamed", "tm": 8,
            "th": _divisor_chunks(hidden, th_target)[-1], "budget": budget}


# --------------------------------------------------------------------------- #
# Kernels                                                                     #
# --------------------------------------------------------------------------- #
def _layernorm_f32(x, gamma, beta):
    mean = jnp.mean(x, axis=-1, keepdims=True)
    xc = x - mean
    var = jnp.mean(xc * xc, axis=-1, keepdims=True)       # biased, like torch
    return xc * jax.lax.rsqrt(var + LN_EPS) * gamma + beta


def _gelu_exact(h):
    # torch nn.GELU() default: exact erf form.
    return 0.5 * h * (1.0 + jax.lax.erf(h * (1.0 / math.sqrt(2.0))))


def _ffn_resident_kernel(x_ref, gamma_ref, beta_ref, w1_ref, b1_ref, w2_ref,
                         b2_ref, o_ref):
    """Whole FFN for one row tile; full W1/W2 stay VMEM-resident across row tiles."""
    xn = _layernorm_f32(x_ref[...].astype(jnp.float32),
                        gamma_ref[...], beta_ref[...]).astype(w1_ref.dtype)
    h = jnp.dot(xn, w1_ref[...], preferred_element_type=jnp.float32) + b1_ref[...]
    h = _gelu_exact(h)
    # Dropout(p=0.0) in eval mode: identity.
    y = jnp.dot(h.astype(w2_ref.dtype), w2_ref[...],
                preferred_element_type=jnp.float32) + b2_ref[...]
    o_ref[...] = y.astype(o_ref.dtype)


def _ffn_streamed_kernel(x_ref, gamma_ref, beta_ref, w1_ref, b1_ref, w2_ref,
                         b2_ref, o_ref, xn_ref, *acc_scratch, acc_in_out):
    """FFN over (row tile, hidden chunk); W1/W2 stream through VMEM chunk by chunk."""
    acc_ref = o_ref if acc_in_out else acc_scratch[0]
    h_idx = pl.program_id(1)

    # --- chunk 0: LayerNorm the row tile once, init accumulator with b2 ---
    @pl.when(h_idx == 0)
    def _():
        xn = _layernorm_f32(x_ref[...].astype(jnp.float32),
                            gamma_ref[...], beta_ref[...])
        xn_ref[...] = xn.astype(xn_ref.dtype)              # bf16 MXU lhs, reused per chunk
        acc_ref[...] = jnp.broadcast_to(b2_ref[...],
                                        acc_ref.shape).astype(acc_ref.dtype)

    # --- Linear(dim -> hidden chunk) + exact GELU ---
    h = jnp.dot(xn_ref[...], w1_ref[...], preferred_element_type=jnp.float32)
    h = _gelu_exact(h + b1_ref[...])
    # Dropout(p=0.0) in eval mode: identity.

    # --- Linear(hidden chunk -> dim), accumulate in f32 ---
    acc_ref[...] += jnp.dot(h.astype(w2_ref.dtype), w2_ref[...],
                            preferred_element_type=jnp.float32).astype(acc_ref.dtype)

    # --- last chunk: copy scratch accumulator to output (only if not in-place) ---
    if not acc_in_out:
        @pl.when(h_idx == pl.num_programs(1) - 1)
        def _():
            o_ref[...] = acc_scratch[0][...].astype(o_ref.dtype)


# --------------------------------------------------------------------------- #
# Wrapper                                                                     #
# --------------------------------------------------------------------------- #
@jax.jit
def feed_forward(x, gamma, beta, w1, b1, w2, b2):
    """x: (..., dim). Same semantics as the torch FeedForward module (eval mode)."""
    dim = x.shape[-1]
    hidden = w1.shape[1]
    M = 1
    for d in x.shape[:-1]:
        M *= d

    out_dtype = x.dtype
    io_bytes = 2 * jnp.dtype(x.dtype).itemsize              # x tile + out tile
    acc_scratch = jnp.dtype(out_dtype) != jnp.dtype(jnp.float32)

    cfg = _choose_config(M, dim, hidden, io_bytes, acc_scratch)
    tm, th = cfg["tm"], cfg["th"]
    M_pad = _round_up(M, tm)
    vmem_limit = int(cfg["budget"])

    x2 = x.reshape(M, dim)
    if M_pad != M:
        x2 = jnp.pad(x2, ((0, M_pad - M), (0, 0)))

    # bf16 MXU operands, f32 accumulation; biases / LN params stay f32.
    w1_b = w1.astype(jnp.bfloat16)
    w2_b = w2.astype(jnp.bfloat16)
    gamma2 = gamma.reshape(1, dim).astype(jnp.float32)
    beta2 = beta.reshape(1, dim).astype(jnp.float32)
    b1_2 = b1.reshape(1, hidden).astype(jnp.float32)
    b2_2 = b2.reshape(1, dim).astype(jnp.float32)

    if cfg["mode"] == "resident":
        # Weights fit VMEM: single grid axis over row tiles, weights loaded once.
        out2 = pl.pallas_call(
            _ffn_resident_kernel,
            out_shape=jax.ShapeDtypeStruct((M_pad, dim), out_dtype),
            grid_spec=pltpu.PrefetchScalarGridSpec(
                num_scalar_prefetch=0,
                grid=(M_pad // tm,),
                in_specs=[
                    pl.BlockSpec((tm, dim), lambda i: (i, 0)),       # x rows
                    pl.BlockSpec((1, dim), lambda i: (0, 0)),        # LN gamma
                    pl.BlockSpec((1, dim), lambda i: (0, 0)),        # LN beta
                    pl.BlockSpec((dim, hidden), lambda i: (0, 0)),   # W1 (resident)
                    pl.BlockSpec((1, hidden), lambda i: (0, 0)),     # b1
                    pl.BlockSpec((hidden, dim), lambda i: (0, 0)),   # W2 (resident)
                    pl.BlockSpec((1, dim), lambda i: (0, 0)),        # b2
                ],
                out_specs=pl.BlockSpec((tm, dim), lambda i: (i, 0)),
            ),
            compiler_params=pltpu.CompilerParams(
                dimension_semantics=("parallel",),
                vmem_limit_bytes=vmem_limit,
            ),
        )(x2, gamma2, beta2, w1_b, b1_2, w2_b, b2_2)
    else:
        # Streamed weights: hidden axis is a sequential reduction ("arbitrary").
        kernel = functools.partial(_ffn_streamed_kernel,
                                   acc_in_out=not acc_scratch)
        scratch = [pltpu.VMEM((tm, dim), jnp.bfloat16)]      # LayerNorm output (MXU lhs)
        if acc_scratch:
            scratch.append(pltpu.VMEM((tm, dim), jnp.float32))  # f32 accumulator
        out2 = pl.pallas_call(
            kernel,
            out_shape=jax.ShapeDtypeStruct((M_pad, dim), out_dtype),
            grid_spec=pltpu.PrefetchScalarGridSpec(
                num_scalar_prefetch=0,
                grid=(M_pad // tm, hidden // th),
                in_specs=[
                    pl.BlockSpec((tm, dim), lambda i, h: (i, 0)),    # x rows
                    pl.BlockSpec((1, dim), lambda i, h: (0, 0)),     # LN gamma
                    pl.BlockSpec((1, dim), lambda i, h: (0, 0)),     # LN beta
                    pl.BlockSpec((dim, th), lambda i, h: (0, h)),    # W1 chunk
                    pl.BlockSpec((1, th), lambda i, h: (0, h)),      # b1 chunk
                    pl.BlockSpec((th, dim), lambda i, h: (h, 0)),    # W2 chunk
                    pl.BlockSpec((1, dim), lambda i, h: (0, 0)),     # b2
                ],
                out_specs=pl.BlockSpec((tm, dim), lambda i, h: (i, 0)),
                scratch_shapes=scratch,
            ),
            compiler_params=pltpu.CompilerParams(
                dimension_semantics=("parallel", "arbitrary"),
                vmem_limit_bytes=vmem_limit,
            ),
        )(x2, gamma2, beta2, w1_b, b1_2, w2_b, b2_2)

    return out2[:M].reshape(x.shape)


# --------------------------------------------------------------------------- #
# Parameters & references                                                     #
# --------------------------------------------------------------------------- #
def _init_params(key, dim, hidden_dim):
    """Deterministic synthetic parameters matching torch layer shapes."""
    k1, k2, k3, k4 = jax.random.split(key, 4)
    gamma = jnp.ones((dim,), jnp.float32)       # torch LayerNorm default init
    beta = jnp.zeros((dim,), jnp.float32)
    lim1 = 1.0 / math.sqrt(dim)
    w1 = jax.random.uniform(k1, (dim, hidden_dim), jnp.float32, -lim1, lim1)
    b1 = jax.random.uniform(k2, (hidden_dim,), jnp.float32, -lim1, lim1)
    lim2 = 1.0 / math.sqrt(hidden_dim)
    w2 = jax.random.uniform(k3, (hidden_dim, dim), jnp.float32, -lim2, lim2)
    b2 = jax.random.uniform(k4, (dim,), jnp.float32, -lim2, lim2)
    return gamma, beta, w1, b1, w2, b2


def _layernorm_ref(x, gamma, beta):
    mean = jnp.mean(x, axis=-1, keepdims=True)
    var = jnp.mean((x - mean) ** 2, axis=-1, keepdims=True)
    return (x - mean) * jax.lax.rsqrt(var + LN_EPS) * gamma + beta


def _reference_f32(x, gamma, beta, w1, b1, w2, b2):
    """Exact f32 FFN reference."""
    xn = _layernorm_ref(x, gamma, beta)
    h = xn @ w1 + b1
    h = 0.5 * h * (1.0 + jax.lax.erf(h / math.sqrt(2.0)))
    return h @ w2 + b2


def _reference_bf16_matmul(x, gamma, beta, w1, b1, w2, b2):
    """Reference with bf16 MXU operands + f32 accumulation (kernel numerics)."""
    xn = _layernorm_ref(x, gamma, beta)
    h = jnp.dot(xn.astype(jnp.bfloat16), w1.astype(jnp.bfloat16),
                preferred_element_type=jnp.float32) + b1
    h = 0.5 * h * (1.0 + jax.lax.erf(h / math.sqrt(2.0)))
    y = jnp.dot(h.astype(jnp.bfloat16), w2.astype(jnp.bfloat16),
                preferred_element_type=jnp.float32) + b2
    return y


if __name__ == "__main__":
    batch, seq, dim, hidden_dim = 2, 8, 32, 64

    key = jax.random.PRNGKey(0)
    kx, kp = jax.random.split(key)
    x = jax.random.normal(kx, (batch, seq, dim), jnp.float32)
    params = _init_params(kp, dim, hidden_dim)

    out = feed_forward(x, *params)
    out = jax.block_until_ready(out)
    assert out.shape == (batch, seq, dim)

    # Tight check vs. a reference that mirrors the kernel's bf16-MXU numerics.
    ref_bf16 = _reference_bf16_matmul(x, *params)
    assert jnp.allclose(out, ref_bf16, atol=5e-3, rtol=5e-3), \
        "mismatch vs bf16-matmul reference"

    # Loose check vs. the exact f32 reference (bf16 MXU rounding only).
    ref_f32 = _reference_f32(x, *params)
    assert jnp.allclose(out, ref_f32, atol=5e-2, rtol=5e-2), \
        "mismatch vs f32 reference"

    print("KERNEL_OK")
</pallas_src>

<mosaic_0001>
module attributes {stable_mosaic.version = 11 : i64} {
  func.func @_ffn_resident_kernel(%arg0: i32, %arg1: memref<8x32xf32, #tpu.memory_space<vmem>>, %arg2: memref<1x32xf32, #tpu.memory_space<vmem>>, %arg3: memref<1x32xf32, #tpu.memory_space<vmem>>, %arg4: memref<32x64xbf16, #tpu.memory_space<vmem>>, %arg5: memref<1x64xf32, #tpu.memory_space<vmem>>, %arg6: memref<64x32xbf16, #tpu.memory_space<vmem>>, %arg7: memref<1x32xf32, #tpu.memory_space<vmem>>, %arg8: memref<8x32xf32, #tpu.memory_space<vmem>>) attributes {dimension_semantics = [#tpu.dimension_semantics<parallel>], iteration_bounds = array<i64: 2>, scalar_prefetch = 0 : i64, scratch_operands = 0 : i64, tpu.core_type = #tpu.core_type<tc>, window_params = [{transform_indices = @transform_0, window_bounds = array<i64: 8, 32>}, {pipeline_mode = #tpu.pipeline_mode<synchronous>, transform_indices = @transform_1, window_bounds = array<i64: 1, 32>}, {pipeline_mode = #tpu.pipeline_mode<synchronous>, transform_indices = @transform_2, window_bounds = array<i64: 1, 32>}, {pipeline_mode = #tpu.pipeline_mode<synchronous>, transform_indices = @transform_3, window_bounds = array<i64: 32, 64>}, {pipeline_mode = #tpu.pipeline_mode<synchronous>, transform_indices = @transform_4, window_bounds = array<i64: 1, 64>}, {pipeline_mode = #tpu.pipeline_mode<synchronous>, transform_indices = @transform_5, window_bounds = array<i64: 64, 32>}, {pipeline_mode = #tpu.pipeline_mode<synchronous>, transform_indices = @transform_6, window_bounds = array<i64: 1, 32>}, {transform_indices = @transform_7, window_bounds = array<i64: 8, 32>}]} {
    %c0 = arith.constant 0 : index
    %c0_0 = arith.constant 0 : index
    %0 = vector.load %arg1[%c0, %c0_0] : memref<8x32xf32, #tpu.memory_space<vmem>>, vector<8x32xf32>
    %c0_1 = arith.constant 0 : index
    %c0_2 = arith.constant 0 : index
    %1 = vector.load %arg2[%c0_1, %c0_2] : memref<1x32xf32, #tpu.memory_space<vmem>>, vector<1x32xf32>
    %c0_3 = arith.constant 0 : index
    %c0_4 = arith.constant 0 : index
    %2 = vector.load %arg3[%c0_3, %c0_4] : memref<1x32xf32, #tpu.memory_space<vmem>>, vector<1x32xf32>
    %cst = arith.constant dense<0.000000e+00> : vector<8xf32>
    %3 = vector.multi_reduction <add>, %0, %cst [1] : vector<8x32xf32> to vector<8xf32>
    %4 = vector.shape_cast %3 : vector<8xf32> to vector<8x1xf32>
    %cst_5 = arith.constant 3.200000e+01 : f32
    %5 = vector.broadcast %cst_5 : f32 to vector<8x1xf32>
    %6 = arith.divf %4, %5 : vector<8x1xf32>
    %7 = vector.broadcast %6 : vector<8x1xf32> to vector<8x32xf32>
    %8 = arith.subf %0, %7 : vector<8x32xf32>
    %9 = arith.mulf %8, %8 : vector<8x32xf32>
    %cst_6 = arith.constant dense<0.000000e+00> : vector<8xf32>
    %10 = vector.multi_reduction <add>, %9, %cst_6 [1] : vector<8x32xf32> to vector<8xf32>
    %11 = vector.shape_cast %10 : vector<8xf32> to vector<8x1xf32>
    %cst_7 = arith.constant 3.200000e+01 : f32
    %12 = vector.broadcast %cst_7 : f32 to vector<8x1xf32>
    %13 = arith.divf %11, %12 : vector<8x1xf32>
    %cst_8 = arith.constant 9.99999974E-6 : f32
    %14 = vector.broadcast %cst_8 : f32 to vector<8x1xf32>
    %15 = arith.addf %13, %14 : vector<8x1xf32>
    %16 = math.rsqrt %15 : vector<8x1xf32>
    %17 = vector.broadcast %16 : vector<8x1xf32> to vector<8x32xf32>
    %18 = arith.mulf %8, %17 : vector<8x32xf32>
    %19 = vector.broadcast %1 : vector<1x32xf32> to vector<8x32xf32>
    %20 = arith.mulf %18, %19 : vector<8x32xf32>
    %21 = vector.broadcast %2 : vector<1x32xf32> to vector<8x32xf32>
    %22 = arith.addf %20, %21 : vector<8x32xf32>
    %23 = arith.truncf %22 : vector<8x32xf32> to vector<8x32xbf16>
    %c0_9 = arith.constant 0 : index
    %c0_10 = arith.constant 0 : index
    %24 = vector.load %arg4[%c0_9, %c0_10] : memref<32x64xbf16, #tpu.memory_space<vmem>>, vector<32x64xbf16>
    %cst_11 = arith.constant dense<0.000000e+00> : vector<8x64xf32>
    %25 = tpu.matmul %23, %24, %cst_11 {dimension_numbers = #tpu.dot_dimension_numbers<[1], [0], [0], [1], [0, 0, 1, 1], [], []>} : vector<8x32xbf16>, vector<32x64xbf16>, vector<8x64xf32> -> vector<8x64xf32>
    %c0_12 = arith.constant 0 : index
    %c0_13 = arith.constant 0 : index
    %26 = vector.load %arg5[%c0_12, %c0_13] : memref<1x64xf32, #tpu.memory_space<vmem>>, vector<1x64xf32>
    %27 = vector.broadcast %26 : vector<1x64xf32> to vector<8x64xf32>
    %28 = arith.addf %25, %27 : vector<8x64xf32>
    %cst_14 = arith.constant 5.000000e-01 : f32
    %29 = vector.broadcast %cst_14 : f32 to vector<8x64xf32>
    %30 = arith.mulf %29, %28 : vector<8x64xf32>
    %cst_15 = arith.constant 0.707106769 : f32
    %31 = vector.broadcast %cst_15 : f32 to vector<8x64xf32>
    %32 = arith.mulf %28, %31 : vector<8x64xf32>
    %33 = math.erf %32 : vector<8x64xf32>
    %cst_16 = arith.constant 1.000000e+00 : f32
    %34 = vector.broadcast %cst_16 : f32 to vector<8x64xf32>
    %35 = arith.addf %34, %33 : vector<8x64xf32>
    %36 = arith.mulf %30, %35 : vector<8x64xf32>
    %37 = arith.truncf %36 : vector<8x64xf32> to vector<8x64xbf16>
    %c0_17 = arith.constant 0 : index
    %c0_18 = arith.constant 0 : index
    %38 = vector.load %arg6[%c0_17, %c0_18] : memref<64x32xbf16, #tpu.memory_space<vmem>>, vector<64x32xbf16>
    %cst_19 = arith.constant dense<0.000000e+00> : vector<8x32xf32>
    %39 = tpu.matmul %37, %38, %cst_19 {dimension_numbers = #tpu.dot_dimension_numbers<[1], [0], [0], [1], [0, 0, 1, 1], [], []>} : vector<8x64xbf16>, vector<64x32xbf16>, vector<8x32xf32> -> vector<8x32xf32>
    %c0_20 = arith.constant 0 : index
    %c0_21 = arith.constant 0 : index
    %40 = vector.load %arg7[%c0_20, %c0_21] : memref<1x32xf32, #tpu.memory_space<vmem>>, vector<1x32xf32>
    %41 = vector.broadcast %40 : vector<1x32xf32> to vector<8x32xf32>
    %42 = arith.addf %39, %41 : vector<8x32xf32>
    %c0_22 = arith.constant 0 : index
    %c0_23 = arith.constant 0 : index
    %43 = vector.load %arg8[%c0_22, %c0_23] : memref<8x32xf32, #tpu.memory_space<vmem>>, vector<8x32xf32>
    tpu.vector_store %arg8[%c0_22, %c0_23], %42 {strides = array<i32>} : memref<8x32xf32, #tpu.memory_space<vmem>>, vector<8x32xf32>,
    return
  }
  func.func @transform_0(%arg0: i32) -> (i32, i32) {
    %c0_i32 = arith.constant 0 : i32
    %c0_i32_0 = arith.constant 0 : i32
    return %arg0, %c0_i32 : i32, i32
  }
  func.func @transform_1(%arg0: i32) -> (i32, i32) {
    %c0_i32 = arith.constant 0 : i32
    %c0_i32_0 = arith.constant 0 : i32
    %c0_i32_1 = arith.constant 0 : i32
    return %c0_i32, %c0_i32_0 : i32, i32
  }
  func.func @transform_2(%arg0: i32) -> (i32, i32) {
    %c0_i32 = arith.constant 0 : i32
    %c0_i32_0 = arith.constant 0 : i32
    %c0_i32_1 = arith.constant 0 : i32
    return %c0_i32, %c0_i32_0 : i32, i32
  }
  func.func @transform_3(%arg0: i32) -> (i32, i32) {
    %c0_i32 = arith.constant 0 : i32
    %c0_i32_0 = arith.constant 0 : i32
    %c0_i32_1 = arith.constant 0 : i32
    return %c0_i32, %c0_i32_0 : i32, i32
  }
  func.func @transform_4(%arg0: i32) -> (i32, i32) {
    %c0_i32 = arith.constant 0 : i32
    %c0_i32_0 = arith.constant 0 : i32
    %c0_i32_1 = arith.constant 0 : i32
    return %c0_i32, %c0_i32_0 : i32, i32
  }
  func.func @transform_5(%arg0: i32) -> (i32, i32) {
    %c0_i32 = arith.constant 0 : i32
    %c0_i32_0 = arith.constant 0 : i32
    %c0_i32_1 = arith.constant 0 : i32
    return %c0_i32, %c0_i32_0 : i32, i32
  }
  func.func @transform_6(%arg0: i32) -> (i32, i32) {
    %c0_i32 = arith.constant 0 : i32
    %c0_i32_0 = arith.constant 0 : i32
    %c0_i32_1 = arith.constant 0 : i32
    return %c0_i32, %c0_i32_0 : i32, i32
  }
  func.func @transform_7(%arg0: i32) -> (i32, i32) {
    %c0_i32 = arith.constant 0 : i32
    %c0_i32_0 = arith.constant 0 : i32
    return %arg0, %c0_i32 : i32, i32
  }
}

</mosaic_0001>

<llo_original>
// kernel: feed_forward.1
$region0: #{feed_forward.1}
  #allocation0 [shape = 'u32[]', space=smem, size = 0x4, offset = 0x4, fixed_abs, tag = 'smem constant byte address 0x4 - core index']
  #allocation1 [shape = 'u32[72,128]{1,0:T(1,128)}', space=vmem, size = 0x9000, scoped, tag = 'internal scratch']
  %s0 = inlined_call_operand.vmem [shape: f32[16,32], index: 0, kind: input, shape index: {}]
  %s1 = inlined_call_operand.vmem [shape: f32[1,32], index: 1, kind: input, shape index: {}]
  %s2 = inlined_call_operand.vmem [shape: f32[1,32], index: 2, kind: input, shape index: {}]
  %s3 = inlined_call_operand.vmem [shape: bf16[32,64], index: 3, kind: input, shape index: {}]
  %s4 = inlined_call_operand.vmem [shape: f32[1,64], index: 4, kind: input, shape index: {}]
  %s5 = inlined_call_operand.vmem [shape: bf16[64,32], index: 5, kind: input, shape index: {}]
  %s6 = inlined_call_operand.vmem [shape: f32[1,32], index: 6, kind: input, shape index: {}]
  %s7 = inlined_call_operand.hbm [shape: f32[16,32], index: 7, kind: output, shape index: {}]
  %s8 = sld [smem:[#allocation0]]
  $region61: #{feed_forward.1} parent=0
    _
  %s10 = ssub.s32 1, %s8
  %s11 = scalar_select 0, %s10, %s8
  $region1: #{feed_forward.1} parent=0
    #allocation2 [shape = 'u8[8192]{0}', space=vmem, size = 0x2000, scoped, tag = 'output window, operand 0']
    #allocation3 [shape = 's32[2]{0}', space=sflag, size = 0x8, scoped, tag = 'scoped memory for feed_forward.1']
    %12 = vsyncpa [#allocation3], 0
    %s13 = scalar_lea.sflag [#allocation3], 1
    %14 = vsyncpa %s13, 0
    loop: start=0, step=1, limit=4
    $region2: #{feed_forward.1} parent=1 // loop_pre_header
      _
    $region3: #{feed_forward.1} parent=1 // loop_header
      %s16 = sphi 0, %s20
      %p17 = scmp.ge.s32.totalorder %s16, 4
      %s26 = sphi 0, %s28
      %s29 = sphi 0, %s26
      %s30 = sphi 0, %s29
      %s46 = sphi 0, %s30
      %s50 = sphi 0, %s50
      %s52 = sphi 0, %s50
      %s53 = sphi 0, %s52
      %s67 = sphi 0, %s53
      %s71 = sphi 0, %s71
      %s73 = sphi 0, %s71
      %s74 = sphi 0, %s73
      %s88 = sphi 0, %s74
      %s92 = sphi 0, %s92
      %s94 = sphi 0, %s92
      %s95 = sphi 0, %s94
      %s109 = sphi 0, %s95
      %s113 = sphi 0, %s113
      %s115 = sphi 0, %s113
      %s116 = sphi 0, %s115
      %s130 = sphi 0, %s116
      %s134 = sphi 0, %s134
      %s136 = sphi 0, %s134
      %s137 = sphi 0, %s136
      %s151 = sphi 0, %s137
      %s155 = sphi 0, %s155
      %s157 = sphi 0, %s155
      %s158 = sphi 0, %s157
      %s172 = sphi 0, %s158
      %s178 = sphi 0, %s180
      %s181 = sphi 0, %s178
      %s182 = sphi 0, %s181
      %s198 = sphi 0, %s182
    $region4: #{feed_forward.1} parent=1 // loop_header_branch
      %19 = sbr.rel (%p17) target = $region8
    $region5: #{feed_forward.1} parent=1 // loop_body
      %s21 = ssub.s32 %s16, 1
      %s22 = ssub.s32 %s16, 2
      %s23 = sadd.s32 %s16, 1
      %s24 = ssub.s32 %s16, %s23
      %p25 = scmp.eq.s32.totalorder %s24, 0
      %s27 = sadd.s32 %s26, 1
      %s28 = scalar_select %p25, %s26, %s27
      %p31 = pneg %p25
      %p32 = scmp.eq.s32.totalorder %s16, 1
      %p33 = por %p31, %p32
      %p34 = scmp.ne.s32.totalorder %s26, %s29
      %p35 = scmp.eq.s32.totalorder %s16, 0
      %p36 = por %p34, %p35
      %p37 = scmp.ne.s32.totalorder %s26, %s29
      %p38 = scmp.eq.s32.totalorder %s21, 1
      %p39 = por %p37, %p38
      %p40 = scmp.ne.s32.totalorder %s29, %s30
      %p41 = scmp.eq.s32.totalorder %s21, 0
      %p42 = por %p40, %p41
      %p43 = scmp.ne.s32.totalorder %s29, %s30
      %p44 = scmp.eq.s32.totalorder %s22, 1
      %p45 = por %p43, %p44
      %p47 = scmp.ne.s32.totalorder %s30, %s46
      %p48 = scmp.eq.s32.totalorder %s22, 0
      %p49 = por %p47, %p48
      %s51 = sadd.s32 %s50, 1
      %p54 = scmp.eq.s32.totalorder %s16, 1
      %p55 = scmp.ne.s32.totalorder %s50, %s52
      %p56 = scmp.eq.s32.totalorder %s16, 0
      %p57 = por %p55, %p56
      %p58 = scmp.ne.s32.totalorder %s50, %s52
      %p59 = scmp.eq.s32.totalorder %s21, 1
      %p60 = por %p58, %p59
      %p61 = scmp.ne.s32.totalorder %s52, %s53
      %p62 = scmp.eq.s32.totalorder %s21, 0
      %p63 = por %p61, %p62
      %p64 = scmp.ne.s32.totalorder %s52, %s53
      %p65 = scmp.eq.s32.totalorder %s22, 1
      %p66 = por %p64, %p65
      %p68 = scmp.ne.s32.totalorder %s53, %s67
      %p69 = scmp.eq.s32.totalorder %s22, 0
      %p70 = por %p68, %p69
      %s72 = sadd.s32 %s71, 1
      %p75 = scmp.eq.s32.totalorder %s16, 1
      %p76 = scmp.ne.s32.totalorder %s71, %s73
      %p77 = scmp.eq.s32.totalorder %s16, 0
      %p78 = por %p76, %p77
      %p79 = scmp.ne.s32.totalorder %s71, %s73
      %p80 = scmp.eq.s32.totalorder %s21, 1
      %p81 = por %p79, %p80
      %p82 = scmp.ne.s32.totalorder %s73, %s74
      %p83 = scmp.eq.s32.totalorder %s21, 0
      %p84 = por %p82, %p83
      %p85 = scmp.ne.s32.totalorder %s73, %s74
      %p86 = scmp.eq.s32.totalorder %s22, 1
      %p87 = por %p85, %p86
      %p89 = scmp.ne.s32.totalorder %s74, %s88
      %p90 = scmp.eq.s32.totalorder %s22, 0
      %p91 = por %p89, %p90
      %s93 = sadd.s32 %s92, 1
      %p96 = scmp.eq.s32.totalorder %s16, 1
      %p97 = scmp.ne.s32.totalorder %s92, %s94
      %p98 = scmp.eq.s32.totalorder %s16, 0
      %p99 = por %p97, %p98
      %p100 = scmp.ne.s32.totalorder %s92, %s94
      %p101 = scmp.eq.s32.totalorder %s21, 1
      %p102 = por %p100, %p101
      %p103 = scmp.ne.s32.totalorder %s94, %s95
      %p104 = scmp.eq.s32.totalorder %s21, 0
      %p105 = por %p103, %p104
      %p106 = scmp.ne.s32.totalorder %s94, %s95
      %p107 = scmp.eq.s32.totalorder %s22, 1
      %p108 = por %p106, %p107
      %p110 = scmp.ne.s32.totalorder %s95, %s109
      %p111 = scmp.eq.s32.totalorder %s22, 0
      %p112 = por %p110, %p111
      %s114 = sadd.s32 %s113, 1
      %p117 = scmp.eq.s32.totalorder %s16, 1
      %p118 = scmp.ne.s32.totalorder %s113, %s115
      %p119 = scmp.eq.s32.totalorder %s16, 0
      %p120 = por %p118, %p119
      %p121 = scmp.ne.s32.totalorder %s113, %s115
      %p122 = scmp.eq.s32.totalorder %s21, 1
      %p123 = por %p121, %p122
      %p124 = scmp.ne.s32.totalorder %s115, %s116
      %p125 = scmp.eq.s32.totalorder %s21, 0
      %p126 = por %p124, %p125
      %p127 = scmp.ne.s32.totalorder %s115, %s116
      %p128 = scmp.eq.s32.totalorder %s22, 1
      %p129 = por %p127, %p128
      %p131 = scmp.ne.s32.totalorder %s116, %s130
      %p132 = scmp.eq.s32.totalorder %s22, 0
      %p133 = por %p131, %p132
      %s135 = sadd.s32 %s134, 1
      %p138 = scmp.eq.s32.totalorder %s16, 1
      %p139 = scmp.ne.s32.totalorder %s134, %s136
      %p140 = scmp.eq.s32.totalorder %s16, 0
      %p141 = por %p139, %p140
      %p142 = scmp.ne.s32.totalorder %s134, %s136
      %p143 = scmp.eq.s32.totalorder %s21, 1
      %p144 = por %p142, %p143
      %p145 = scmp.ne.s32.totalorder %s136, %s137
      %p146 = scmp.eq.s32.totalorder %s21, 0
      %p147 = por %p145, %p146
      %p148 = scmp.ne.s32.totalorder %s136, %s137
      %p149 = scmp.eq.s32.totalorder %s22, 1
      %p150 = por %p148, %p149
      %p152 = scmp.ne.s32.totalorder %s137, %s151
      %p153 = scmp.eq.s32.totalorder %s22, 0
      %p154 = por %p152, %p153
      %s156 = sadd.s32 %s155, 1
      %p159 = scmp.eq.s32.totalorder %s16, 1
      %p160 = scmp.ne.s32.totalorder %s155, %s157
      %p161 = scmp.eq.s32.totalorder %s16, 0
      %p162 = por %p160, %p161
      %p163 = scmp.ne.s32.totalorder %s155, %s157
      %p164 = scmp.eq.s32.totalorder %s21, 1
      %p165 = por %p163, %p164
      %p166 = scmp.ne.s32.totalorder %s157, %s158
      %p167 = scmp.eq.s32.totalorder %s21, 0
      %p168 = por %p166, %p167
      %p169 = scmp.ne.s32.totalorder %s157, %s158
      %p170 = scmp.eq.s32.totalorder %s22, 1
      %p171 = por %p169, %p170
      %p173 = scmp.ne.s32.totalorder %s158, %s172
      %p174 = scmp.eq.s32.totalorder %s22, 0
      %p175 = por %p173, %p174
      %s176 = ssub.s32 %s16, %s23
      %p177 = scmp.eq.s32.totalorder %s176, 0
      %s179 = sadd.s32 %s178, 1
      %s180 = scalar_select %p177, %s178, %s179
      %p183 = pneg %p177
      %p184 = scmp.eq.s32.totalorder %s16, 1
      %p185 = por %p183, %p184
      %p186 = scmp.ne.s32.totalorder %s178, %s181
      %p187 = scmp.eq.s32.totalorder %s16, 0
      %p188 = por %p186, %p187
      %p189 = scmp.ne.s32.totalorder %s178, %s181
      %p190 = scmp.eq.s32.totalorder %s21, 1
      %p191 = por %p189, %p190
      %p192 = scmp.ne.s32.totalorder %s181, %s182
      %p193 = scmp.eq.s32.totalorder %s21, 0
      %p194 = por %p192, %p193
      %p195 = scmp.ne.s32.totalorder %s181, %s182
      %p196 = scmp.eq.s32.totalorder %s22, 1
      %p197 = por %p195, %p196
      %p199 = scmp.ne.s32.totalorder %s182, %s198
      %p200 = scmp.eq.s32.totalorder %s22, 0
      %p201 = por %p199, %p200
      %p202 = scmp.le.s32.totalorder 1, %s16
      %p203 = scmp.lt.s32.totalorder %s16, 3
      %p204 = pnand %p202, %p203
      %p205 = pneg %p204
      // Predicated region
      $region9: #{feed_forward.1} parent=5 // pred_check
        _
      $region10: #{feed_forward.1} parent=5 // pred_check_branch
        %207 = sbr.rel (%p204) target = $region12
      $region11: #{feed_forward.1} parent=5 // pred_region
        %s208 = ssub.s32 %s16, 1
        // Predicated region
        $region13: #{feed_forward.1} parent=11 // pred_check
          %p209 = pneg %p63
        $region14: #{feed_forward.1} parent=11 // pred_check_branch
          %211 = sbr.rel (%p209) target = $region16
        $region15: #{feed_forward.1} parent=11 // pred_region
          _
        $region16: #{feed_forward.1} parent=11 // pred_fallthru
          _
        // Predicated region
        $region17: #{feed_forward.1} parent=11 // pred_check
          %p212 = pneg %p84
        $region18: #{feed_forward.1} parent=11 // pred_check_branch
          %214 = sbr.rel (%p212) target = $region20
        $region19: #{feed_forward.1} parent=11 // pred_region
          _
        $region20: #{feed_forward.1} parent=11 // pred_fallthru
          _
        // Predicated region
        $region21: #{feed_forward.1} parent=11 // pred_check
          %p215 = pneg %p105
        $region22: #{feed_forward.1} parent=11 // pred_check_branch
          %217 = sbr.rel (%p215) target = $region24
        $region23: #{feed_forward.1} parent=11 // pred_region
          _
        $region24: #{feed_forward.1} parent=11 // pred_fallthru
          _
        // Predicated region
        $region25: #{feed_forward.1} parent=11 // pred_check
          %p218 = pneg %p126
        $region26: #{feed_forward.1} parent=11 // pred_check_branch
          %220 = sbr.rel (%p218) target = $region28
        $region27: #{feed_forward.1} parent=11 // pred_region
          _
        $region28: #{feed_forward.1} parent=11 // pred_fallthru
          _
        // Predicated region
        $region29: #{feed_forward.1} parent=11 // pred_check
          %p221 = pneg %p147
        $region30: #{feed_forward.1} parent=11 // pred_check_branch
          %223 = sbr.rel (%p221) target = $region32
        $region31: #{feed_forward.1} parent=11 // pred_region
          _
        $region32: #{feed_forward.1} parent=11 // pred_fallthru
          _
        // Predicated region
        $region33: #{feed_forward.1} parent=11 // pred_check
          %p224 = pneg %p168
        $region34: #{feed_forward.1} parent=11 // pred_check_branch
          %226 = sbr.rel (%p224) target = $region36
        $region35: #{feed_forward.1} parent=11 // pred_region
          _
        $region36: #{feed_forward.1} parent=11 // pred_fallthru
          _
      $region12: #{feed_forward.1} parent=5 // pred_fallthru
        _
      %p227 = scmp.lt.s32.totalorder %s16, 2
      // Predicated region
      $region37: #{feed_forward.1} parent=5 // pred_check
        %p228 = pneg %p227
      $region38: #{feed_forward.1} parent=5 // pred_check_branch
        %230 = sbr.rel (%p228) target = $region40
      $region39: #{feed_forward.1} parent=5 // pred_region
        // Predicated region
        $region41: #{feed_forward.1} parent=39 // pred_check
          %p231 = pneg %p36
        $region42: #{feed_forward.1} parent=39 // pred_check_branch
          %233 = sbr.rel (%p231) target = $region44
        $region43: #{feed_forward.1} parent=39 // pred_region
          %p234 = scmp.lt.s32.totalorder %s16, 1
          %s235 = scalar_select %p234, %s16, 1
          %s236 = smul.addr %s235, 8
          %s237 = scalar_lea.vmem %s0, %s236
        $region44: #{feed_forward.1} parent=39 // pred_fallthru
          _
      $region40: #{feed_forward.1} parent=5 // pred_fallthru
        _
      %p238 = scmp.le.s32.totalorder 1, %s16
      %p239 = scmp.lt.s32.totalorder %s16, 3
      %p240 = pnand %p238, %p239
      %p241 = pneg %p240
      // Predicated region
      $region45: #{feed_forward.1} parent=5 // pred_check
        _
      $region46: #{feed_forward.1} parent=5 // pred_check_branch
        %243 = sbr.rel (%p240) target = $region48
      $region47: #{feed_forward.1} parent=5 // pred_region
        %s244 = ssub.s32 %s16, 1
        %p245 = scmp.lt.s32.totalorder %s21, 1
        %s246 = scalar_select %p245, %s21, 1
        %s247 = smul.addr %s246, 8
        %s248 = scalar_lea.vmem %s0, %s247
        %p249 = pneg %p42
        %p250 = pneg %p39
        %p251 = pneg %p63
        %p252 = pneg %p60
        %p253 = pneg %p84
        %p254 = pneg %p81
        %p255 = pneg %p105
        %p256 = pneg %p102
        %p257 = pneg %p126
        %p258 = pneg %p123
        %p259 = pneg %p147
        %p260 = pneg %p144
        %p261 = pneg %p168
        %p262 = pneg %p165
        %p263 = pneg %p194
        %p264 = pneg %p191
        %s265 = sand.u32 %s181, 1
        %s266 = scalar_lea.sflag [#allocation3], %s265
        %s267 = sand.u32 %s181, 1
        %s268 = smul.addr %s267, 8
        %s269 = scalar_lea.vmem [#allocation2], %s268
        %p270 = scmp.lt.s32.totalorder %s21, 1
        %s271 = scalar_select %p270, %s21, 1
        %s272 = smul.addr %s271, 8
        %s273 = scalar_lea.vmem %s0, %s272
        %v275 = vld [vmem:[%s273] sm:$0xff]
        %v276 = vld [vmem:[%s1] sm:$0x1]
        %v277 = vld [vmem:[%s2] sm:$0x1]
        %vm278 = vcmask 261120
        %v279 = vsel %vm278, %v275, 0.0
        %280 = vadd.xlane.f32.xlu0 %v279
        %v281 = vpop.xlane.xlu0 %280
        %v282 = vrcp.pop 32.0
        %v283 = vmul.f32 32.0, %v282
        %v284 = vsub.f32 1.0, %v283
        %v285 = vmul.f32 %v282, %v284
        %v286 = vadd.f32 %v282, %v285
        %vm287 = vweird.f32 %v282
        %v288 = vsel %vm287, %v282, %v286
        %v289 = vmul.f32 %v281, %v288
        %v290 = vsub.f32 %v275, %v289
        %v291 = vmul.f32 %v290, %v290
        %v292 = vsel %vm278, %v291, 0.0
        %293 = vadd.xlane.f32.xlu0 %v292
        %v294 = vpop.xlane.xlu0 %293
        %v295 = vmul.f32 %v294, %v288
        %v296 = vadd.f32 %v295, 1e-05
        %v297 = vrsqrt.pop %v296
        %v298 = vmul.f32 %v297, %v296
        %v299 = vmul.f32 %v298, %v297
        %v300 = vmul.f32 0.5, %v299
        %v301 = vsub.f32 1.5, %v300
        %v302 = vmul.f32 %v297, %v301
        %vm303 = vweird.f32 %v296
        %vm304 = vweird.f32 %v297
        %vm305 = vmor %vm303, %vm304
        %v306 = vsel %vm305, %v297, %v302
        %v307 = vmul.f32 %v290, %v306
        %v309 = vperm.slane %v276, 0
        %v311 = vmul.f32 %v307, %v309
        %v313 = vperm.slane %v277, 0
        %v315 = vadd.f32 %v311, %v313
        %v316 = vpack.c.bf16 %v315, %v315
        %v317 = vld [vmem:[%s3] sm:$0xf]
        %v318 = vld [vmem:[%s3 + $0x4] sm:$0xf]
        %v319 = vld [vmem:[%s3 + $0x8] sm:$0xf]
        %v320 = vld [vmem:[%s3 + $0xc] sm:$0xf]
        %v321 = vld [vmem:[%s4] sm:$0x1]
        %v323 = vperm.slane %v321, 0
        %v329 = vunpack.c.l.b16 %v317
        %v330 = vunpack.c.l.b16 %v318
        %v331 = vunpack.c.l.b16 %v319
        %v332 = vunpack.c.l.b16 %v320
        %v333 = vpack.c.b16 %v330, %v329
        %v334 = vpack.c.b16 %v332, %v331
        %v338 = vsel %vm278, %v316, 0
        %340 = vmatpush.bf16.msra.mxu0 0
        %341 = vmatpush.bf16.msra.mxu0 0
        %342 = vmatpush.bf16.msra.mxu0 0
        %343 = vmatpush.bf16.msra.mxu0 0
        %344 = vmatpush.bf16.msra.mxu0 0
        %345 = vmatpush.bf16.msra.mxu0 0
        %346 = vmatpush.bf16.msra.mxu0 %v334
        %347 = vmatpush.bf16.msra.mxu0 %v333
        %348 = vmatmul.bf16.gmra.mxu0 %v338
        %v349 = vpop.f32.mrf.mxu0
        %v350 = vadd.f32 %v323, %v349
        %v351 = vpop.f32.mrf.mxu0
        %352 = vdwg.mxu0
        %v353 = vmul.f32 %v350, 0.5
        %v354 = vmul.f32 %v350, 0.70710677
        %v355 = vmul.f32 %v354, %v354
        %v356 = vmin.f32 16.0, %v355
        %v357 = vmul.f32 %v356, 2.1237322e-06
        %v358 = vadd.f32 %v357, 0.00028619796
        %v359 = vmul.f32 %v356, %v358
        %v360 = vadd.f32 %v359, 0.0036580483
        %v361 = vmul.f32 %v356, %v360
        %v362 = vadd.f32 %v361, 0.05243302
        %v363 = vmul.f32 %v356, %v362
        %v364 = vadd.f32 %v363, 0.18741608
        %v365 = vmul.f32 %v356, %v364
        %v366 = vadd.f32 %v365, 1.1283791
        %v367 = vmul.f32 %v354, %v366
        %v368 = vmul.f32 %v356, 3.8918573e-05
        %v369 = vadd.f32 %v368, 0.001143296
        %v370 = vmul.f32 %v356, %v369
        %v371 = vadd.f32 %v370, 0.014752088
        %v372 = vmul.f32 %v356, %v371
        %v373 = vadd.f32 %v372, 0.112945676
        %v374 = vmul.f32 %v356, %v373
        %v375 = vadd.f32 %v374, 0.4994258
        %v376 = vmul.f32 %v356, %v375
        %v377 = vadd.f32 %v376, 1.0
        %v378 = vrcp.pop %v377
        %v379 = vmul.f32 %v377, %v378
        %v380 = vsub.f32 1.0, %v379
        %v381 = vmul.f32 %v378, %v380
        %v382 = vadd.f32 %v378, %v381
        %vm383 = vweird.f32 %v377
        %vm384 = vweird.f32 %v378
        %vm385 = vmor %vm383, %vm384
        %v386 = vsel %vm385, %v378, %v382
        %v387 = vand.u32 2147483647, %v377
        %vm388 = vcmp.eq.f32.partialorder %v387, 8.507059e+37
        %v389 = vand.u32 %v377, 2147483648
        %v390 = vor.u32 1.1754944e-38, %v389
        %v391 = vsel %vm388, %v390, %v386
        %v392 = vmul.f32 %v367, %v391
        %v393 = vmin.f32 %v392, 1.0
        %v394 = vmax.f32 %v393, -1.0
        %v395 = vadd.f32 %v394, 1.0
        %v396 = vmul.f32 %v353, %v395
        %v397 = vpack.c.bf16 %v396, %v396
        %v398 = vld [vmem:[%s5] sm:$0xf]
        %v399 = vld [vmem:[%s5 + $0x4] sm:$0xf]
        %v400 = vld [vmem:[%s5 + $0x8] sm:$0xf]
        %v401 = vld [vmem:[%s5 + $0xc] sm:$0xf]
        %v402 = vld [vmem:[%s5 + $0x10] sm:$0xf]
        %v403 = vld [vmem:[%s5 + $0x14] sm:$0xf]
        %v404 = vld [vmem:[%s5 + $0x18] sm:$0xf]
        %v405 = vld [vmem:[%s5 + $0x1c] sm:$0xf]
        %v406 = vld [vmem:[%s6] sm:$0x1]
        %v408 = vperm.slane %v406, 0
        %v418 = vunpack.c.l.b16 %v398
        %v419 = vunpack.c.l.b16 %v399
        %v420 = vunpack.c.l.b16 %v400
        %v421 = vunpack.c.l.b16 %v401
        %v422 = vunpack.c.l.b16 %v402
        %v423 = vunpack.c.l.b16 %v403
        %v424 = vunpack.c.l.b16 %v404
        %v425 = vunpack.c.l.b16 %v405
        %v426 = vpack.c.b16 %v419, %v418
        %v427 = vpack.c.b16 %v421, %v420
        %v428 = vpack.c.b16 %v423, %v422
        %v429 = vpack.c.b16 %v425, %v424
        %vm434 = vcmask 523264
        %v436 = vsel %vm434, %v397, 0
        %438 = vmatpush.bf16.msra.mxu0 0
        %439 = vmatpush.bf16.msra.mxu0 0
        %440 = vmatpush.bf16.msra.mxu0 0
        %441 = vmatpush.bf16.msra.mxu0 0
        %442 = vmatpush.bf16.msra.mxu0 %v429
        %443 = vmatpush.bf16.msra.mxu0 %v428
        %444 = vmatpush.bf16.msra.mxu0 %v427
        %445 = vmatpush.bf16.msra.mxu0 %v426
        %446 = vmatmul.bf16.gmra.mxu0 %v436
        %v447 = vpop.f32.mrf.mxu0
        %v448 = vadd.f32 %v408, %v447
        %v449 = vpop.f32.mrf.mxu0
        %450 = vdwg.mxu0
        %451 = vst.msk [vmem:[%s269] sm:$0xff] %vm278, %v448
        %s452 = sand.u32 %s181, 1
        %s453 = scalar_lea.sflag [#allocation3], %s452
        %s454 = sand.u32 %s181, 1
        %s455 = smul.addr %s454, 8
        %s456 = scalar_lea.vmem [#allocation2], %s455
        // Predicated region
        $region49: #{feed_forward.1} parent=47 // pred_check
          %p457 = pneg %p191
        $region50: #{feed_forward.1} parent=47 // pred_check_branch
          %459 = sbr.rel (%p457) target = $region52
        $region51: #{feed_forward.1} parent=47 // pred_region
          %461 = vsyncadd %s453, 0
          %s462 = smul.addr %s21, 8
          %s463 = scalar_lea.hbm %s7, %s462
          %s465 = sshll.u32 %s456, 4
          %s466 = int_to_ptr.vmem [resolvable:$true] %s465
          %s467 = sshll.u32 %s463, 4
          %s468 = int_to_ptr.hbm [resolvable:$true] %s467
          %470 = dma.vmem_to_hbm [thread:$0]  %s466, 128, %s468, %s453
        $region52: #{feed_forward.1} parent=47 // pred_fallthru
          _
      $region48: #{feed_forward.1} parent=5 // pred_fallthru
        _
      %p471 = scmp.le.s32.totalorder 2, %s16
      // Predicated region
      $region53: #{feed_forward.1} parent=5 // pred_check
        %p472 = pneg %p471
      $region54: #{feed_forward.1} parent=5 // pred_check_branch
        %474 = sbr.rel (%p472) target = $region56
      $region55: #{feed_forward.1} parent=5 // pred_region
        %s475 = ssub.s32 %s16, 2
        // Predicated region
        $region57: #{feed_forward.1} parent=55 // pred_check
          %p476 = pneg %p197
        $region58: #{feed_forward.1} parent=55 // pred_check_branch
          %478 = sbr.rel (%p476) target = $region60
        $region59: #{feed_forward.1} parent=55 // pred_region
          %s479 = sand.u32 %s182, 1
          %s480 = scalar_lea.sflag [#allocation3], %s479
          %s481 = sand.u32 %s182, 1
          %s482 = smul.addr %s481, 8
          %s483 = scalar_lea.vmem [#allocation2], %s482
          %485 = dma.done %s480, 128
        $region60: #{feed_forward.1} parent=55 // pred_fallthru
          _
      $region56: #{feed_forward.1} parent=5 // pred_fallthru
        _
    $region6: #{feed_forward.1} parent=1 // loop_footer
      %s20 = sadd.s32 1, %s16
    $region7: #{feed_forward.1} parent=1 // loop_footer_branch
      %15 = sbr.rel target = $region3
    $region8: #{feed_forward.1} parent=1 // loop_exit
      _
    %486 = vsyncpa [#allocation3], 1
    %s487 = scalar_lea.sflag [#allocation3], 1
    %488 = vsyncpa %s487, 1

</llo_original>
